<compile_context>
chip_gen: v6e
topology: v6e:2x2x1
jax: 0.10.0
libtpu: 0.0.40
codegen_flags: <defaults>
</compile_context>

<pallas_src>
import functools

import jax
import jax.numpy as jnp
from jax.experimental import pallas as pl
from jax.experimental.pallas import tpu as pltpu


def _round_up(x, m):
    return ((x + m - 1) // m) * m


_SINGLE_BLOCK_MAX = 128  # above this, tile the batch (>= 2 grid steps)


def _decoder_kernel(gamma_ref, t_ref, w1_ref, w2_ref, b2_ref, out_ref):
    # gamma is a scalar in SMEM (runtime argument -> cannot be folded into W1).
    gamma = gamma_ref[0]

    # x_aug = [t * gamma, 1]  (bf16 for the MXU; the trailing ones column
    # multiplies the folded-in bias row of W1).
    x = (t_ref[...] * gamma).astype(jnp.bfloat16)
    ones = jnp.ones((x.shape[0], 1), dtype=jnp.bfloat16)
    x_aug = jnp.concatenate([x, ones], axis=-1)

    # hidden = ReLU(x @ W1 + b1): bf16 MXU inputs, f32 accumulation.  The ReLU
    # is done on the bf16 copy (relu commutes with round-to-bf16), which halves
    # vreg / store traffic for the (TB, 896) intermediate.
    h = jnp.dot(x_aug, w1_ref[...], preferred_element_type=jnp.float32)
    h = jnp.maximum(h.astype(jnp.bfloat16), 0.0)

    # logits = hidden @ W2 + b2  (bf16-in / f32-acc; b2 add is only (TB, 128)).
    logits = jnp.dot(h, w2_ref[...], preferred_element_type=jnp.float32)
    out_ref[...] = (logits + b2_ref[...]).astype(out_ref.dtype)


def prepare_decoder_params(w1, b1, w2, b2):
    """One-time parameter prep (do this at init, not per call).

    w1 : (K, H)    float32  (transposed vs PyTorch Linear.weight, which is (H, K))
    b1 : (H,)      float32
    w2 : (H, n_y)  float32
    b2 : (n_y,)    float32

    Returns bf16 weights zero-padded to lane-friendly sizes (H 800 -> 896,
    n_y 10 -> 128), with b1 folded into an extra contraction row of W1.
    """
    K, H = w1.shape
    n_y = w2.shape[1]
    H_pad = _round_up(H, 128)
    N_pad = _round_up(n_y, 128)

    w1_aug = jnp.zeros((K + 1, H_pad), jnp.bfloat16)
    w1_aug = w1_aug.at[:K, :H].set(w1.astype(jnp.bfloat16))
    w1_aug = w1_aug.at[K, :H].set(b1.astype(jnp.bfloat16))   # folded bias row

    w2p = jnp.zeros((H_pad, N_pad), jnp.bfloat16).at[:H, :n_y].set(
        w2.astype(jnp.bfloat16))
    b2p = jnp.zeros((1, N_pad), jnp.float32).at[:, :n_y].set(
        b2.astype(jnp.float32))
    return {"w1": w1_aug, "w2": w2p, "b2": b2p}


@functools.partial(jax.jit, static_argnames=("n_y", "batch_tile"))
def deterministic_decoder(t, params, gamma=1.0, *, n_y, batch_tile=1024):
    """Pallas implementation of Deterministic_decoder.forward.

    t      : (B, K) float32
    params : dict from prepare_decoder_params
    n_y    : static number of classes (used only to slice the padded output)
    returns logits_y : (B, n_y) float32
    """
    w1, w2, b2 = params["w1"], params["w2"], params["b2"]
    B, K = t.shape
    K_aug, H_pad = w1.shape
    N_pad = w2.shape[1]
    assert K_aug == K + 1, "params were prepared for a different latent size K"

    gamma_arr = jnp.asarray(gamma, dtype=jnp.float32).reshape((1,))

    flops = 2 * B * (K_aug * H_pad + H_pad * N_pad)
    bytes_accessed = int(t.size * t.dtype.itemsize
                         + w1.size * w1.dtype.itemsize
                         + w2.size * w2.dtype.itemsize
                         + b2.size * b2.dtype.itemsize
                         + B * N_pad * 4)
    cost = pl.CostEstimate(flops=flops, transcendentals=0,
                           bytes_accessed=bytes_accessed)

    if B <= _SINGLE_BLOCK_MAX:
        # ---- Small batch: single whole-array block.  No grid, no pipelining
        # bookkeeping, no (8,128) constraint -> no batch padding needed. ----
        out = pl.pallas_call(
            _decoder_kernel,
            out_shape=jax.ShapeDtypeStruct((B, N_pad), jnp.float32),
            in_specs=[
                pl.BlockSpec(memory_space=pltpu.MemorySpace.SMEM),   # gamma
                pl.BlockSpec(memory_space=pltpu.MemorySpace.VMEM),   # t
                pl.BlockSpec(memory_space=pltpu.MemorySpace.VMEM),   # W1 (bf16, bias folded)
                pl.BlockSpec(memory_space=pltpu.MemorySpace.VMEM),   # W2 (bf16)
                pl.BlockSpec(memory_space=pltpu.MemorySpace.VMEM),   # b2
            ],
            out_specs=pl.BlockSpec(memory_space=pltpu.MemorySpace.VMEM),
            cost_estimate=cost,
        )(gamma_arr, t, w1, w2, b2)
    else:
        # ---- Large batch: tile rows.  TB is capped so there are >= 2 grid
        # steps (lets the "parallel" axis shard across both TensorCores on
        # v7x); the last tile may be ragged (Pallas masks OOB rows), so t is
        # never padded/copied in the wrapper.  Weights use constant index_maps
        # and stay VMEM-resident across steps. ----
        TB = min(batch_tile, _round_up((B + 1) // 2, 8))
        TB = max(TB, 8)
        grid = (pl.cdiv(B, TB),)
        out = pl.pallas_call(
            _decoder_kernel,
            out_shape=jax.ShapeDtypeStruct((B, N_pad), jnp.float32),
            grid=grid,
            in_specs=[
                pl.BlockSpec(memory_space=pltpu.MemorySpace.SMEM),   # gamma
                pl.BlockSpec((TB, K), lambda i: (i, 0)),             # t tile
                pl.BlockSpec((K_aug, H_pad), lambda i: (0, 0)),      # W1 (resident)
                pl.BlockSpec((H_pad, N_pad), lambda i: (0, 0)),      # W2 (resident)
                pl.BlockSpec((1, N_pad), lambda i: (0, 0)),          # b2 (resident)
            ],
            out_specs=pl.BlockSpec((TB, N_pad), lambda i: (i, 0)),
            compiler_params=pltpu.CompilerParams(
                dimension_semantics=("parallel",)),
            cost_estimate=cost,
        )(gamma_arr, t, w1, w2, b2)

    # Un-pad lanes to the user-facing class count (n_y is static, so this is a
    # plain XLA slice).  If downstream can consume the lane-padded (B, 128)
    # logits directly, skip this slice to save one HBM round-trip.
    return out[:, :n_y]


def _reference(t, w1, b1, w2, b2, gamma=1.0):
    x = t * gamma
    h = jnp.maximum(x @ w1 + b1, 0.0)
    return h @ w2 + b2


if __name__ == "__main__":
    # Module-consistent small shapes: K (latent) = 32, hidden = 800 (fixed by
    # the module), n_y = 10 classes, batch = 8.
    B, K, H, N_Y = 8, 32, 800, 10

    key = jax.random.PRNGKey(0)
    k_t, k_w1, k_b1, k_w2, k_b2, k_t2 = jax.random.split(key, 6)

    t = jax.random.normal(k_t, (B, K), dtype=jnp.float32)

    # Deterministic PyTorch-Linear-like uniform init.
    lim1 = 1.0 / (K ** 0.5)
    lim2 = 1.0 / (H ** 0.5)
    w1 = jax.random.uniform(k_w1, (K, H), jnp.float32, minval=-lim1, maxval=lim1)
    b1 = jax.random.uniform(k_b1, (H,), jnp.float32, minval=-lim1, maxval=lim1)
    w2 = jax.random.uniform(k_w2, (H, N_Y), jnp.float32, minval=-lim2, maxval=lim2)
    b2 = jax.random.uniform(k_b2, (N_Y,), jnp.float32, minval=-lim2, maxval=lim2)

    params = prepare_decoder_params(w1, b1, w2, b2)

    # --- small-batch path (single block, no grid) ---
    logits = deterministic_decoder(t, params, 1.0, n_y=N_Y)
    jax.block_until_ready(logits)
    ref = _reference(t, w1, b1, w2, b2, 1.0)
    assert logits.shape == (B, N_Y)
    assert jnp.allclose(logits, ref, atol=2e-2, rtol=2e-2), \
        "small-batch mismatch vs reference"

    # --- batch-tiled path (>=2 parallel grid steps, ragged last tile), gamma != 1 ---
    B2 = 300
    t2 = jax.random.normal(k_t2, (B2, K), dtype=jnp.float32)
    logits2 = deterministic_decoder(t2, params, 0.5, n_y=N_Y)
    jax.block_until_ready(logits2)
    ref2 = _reference(t2, w1, b1, w2, b2, 0.5)
    assert logits2.shape == (B2, N_Y)
    assert jnp.allclose(logits2, ref2, atol=2e-2, rtol=2e-2), \
        "tiled-batch mismatch vs reference"

    print("KERNEL_OK")
</pallas_src>

<mosaic_0001>
module attributes {stable_mosaic.version = 11 : i64} {
  func.func @_decoder_kernel(%arg0: memref<1xf32, #tpu.memory_space<smem>>, %arg1: memref<8x32xf32, #tpu.memory_space<vmem>>, %arg2: memref<33x896xbf16, #tpu.memory_space<vmem>>, %arg3: memref<896x128xbf16, #tpu.memory_space<vmem>>, %arg4: memref<1x128xf32, #tpu.memory_space<vmem>>, %arg5: memref<8x128xf32, #tpu.memory_space<vmem>>) attributes {dimension_semantics = [], scalar_prefetch = 0 : i64, scratch_operands = 0 : i64, tpu.core_type = #tpu.core_type<tc>} {
    %c0 = arith.constant 0 : index
    %0 = memref.load %arg0[%c0] : memref<1xf32, #tpu.memory_space<smem>>
    %c0_0 = arith.constant 0 : index
    %c0_1 = arith.constant 0 : index
    %1 = vector.load %arg1[%c0_0, %c0_1] : memref<8x32xf32, #tpu.memory_space<vmem>>, vector<8x32xf32>
    %2 = vector.broadcast %0 : f32 to vector<8x32xf32>
    %3 = arith.mulf %1, %2 : vector<8x32xf32>
    %4 = arith.truncf %3 : vector<8x32xf32> to vector<8x32xbf16>
    %cst = arith.constant 1.000000e+00 : bf16
    %5 = vector.broadcast %cst : bf16 to vector<8x1xbf16>
    %6 = tpu.concatenate %4, %5 in 1 : vector<8x32xbf16>, vector<8x1xbf16> -> vector<8x33xbf16>
    %c0_2 = arith.constant 0 : index
    %c0_3 = arith.constant 0 : index
    %7 = vector.load %arg2[%c0_2, %c0_3] : memref<33x896xbf16, #tpu.memory_space<vmem>>, vector<33x896xbf16>
    %cst_4 = arith.constant dense<0.000000e+00> : vector<8x896xf32>
    %8 = tpu.matmul %6, %7, %cst_4 {dimension_numbers = #tpu.dot_dimension_numbers<[1], [0], [0], [1], [0, 0, 1, 1], [], []>} : vector<8x33xbf16>, vector<33x896xbf16>, vector<8x896xf32> -> vector<8x896xf32>
    %9 = arith.truncf %8 : vector<8x896xf32> to vector<8x896xbf16>
    %cst_5 = arith.constant 0.000000e+00 : bf16
    %10 = vector.broadcast %cst_5 : bf16 to vector<8x896xbf16>
    %11 = arith.maximumf %9, %10 : vector<8x896xbf16>
    %c0_6 = arith.constant 0 : index
    %c0_7 = arith.constant 0 : index
    %12 = vector.load %arg3[%c0_6, %c0_7] : memref<896x128xbf16, #tpu.memory_space<vmem>>, vector<896x128xbf16>
    %cst_8 = arith.constant dense<0.000000e+00> : vector<8x128xf32>
    %13 = tpu.matmul %11, %12, %cst_8 {dimension_numbers = #tpu.dot_dimension_numbers<[1], [0], [0], [1], [0, 0, 1, 1], [], []>} : vector<8x896xbf16>, vector<896x128xbf16>, vector<8x128xf32> -> vector<8x128xf32>
    %c0_9 = arith.constant 0 : index
    %c0_10 = arith.constant 0 : index
    %14 = vector.load %arg4[%c0_9, %c0_10] : memref<1x128xf32, #tpu.memory_space<vmem>>, vector<1x128xf32>
    %15 = vector.broadcast %14 : vector<1x128xf32> to vector<8x128xf32>
    %16 = arith.addf %13, %15 : vector<8x128xf32>
    %c0_11 = arith.constant 0 : index
    %c0_12 = arith.constant 0 : index
    %17 = vector.load %arg5[%c0_11, %c0_12] : memref<8x128xf32, #tpu.memory_space<vmem>>, vector<8x128xf32>
    tpu.vector_store %arg5[%c0_11, %c0_12], %16 {strides = array<i32>} : memref<8x128xf32, #tpu.memory_space<vmem>>, vector<8x128xf32>,
    return
  }
}

</mosaic_0001>

<llo_original>
// kernel: deterministic_decoder.1
$region0: #{deterministic_decoder.1}
  #allocation0 [shape = 'u32[]', space=smem, size = 0x4, offset = 0x4, fixed_abs, tag = 'smem constant byte address 0x4 - core index']
  #allocation1 [shape = 'u32[144,128]{1,0:T(1,128)}', space=vmem, size = 0x12000, scoped, tag = 'internal scratch']
  #allocation2 [shape = 'f32[1]{0:T(128)S(6)}', space=smem, size = 0x200, scoped, tag = 'scoped memory for deterministic_decoder.1']
  %s0 = inlined_call_operand.<no memory space> [shape: f32[1], index: 0, kind: input, shape index: {}]
  %s1 = inlined_call_operand.hbm [shape: f32[8,32], index: 1, kind: input, shape index: {}]
  %s2 = inlined_call_operand.hbm [shape: bf16[33,896], index: 2, kind: input, shape index: {}]
  %s3 = inlined_call_operand.hbm [shape: bf16[896,128], index: 3, kind: input, shape index: {}]
  %s4 = inlined_call_operand.vmem [shape: f32[1,128], index: 4, kind: input, shape index: {}]
  %s5 = inlined_call_operand.hbm [shape: f32[8,128], index: 5, kind: output, shape index: {}]
  %s6 = sld [smem:[#allocation0]]
  $region42: #{deterministic_decoder.1} parent=0
    _
  %s8 = ssub.s32 1, %s6
  %s9 = scalar_select 0, %s8, %s6
  %10 = sst [smem:[#allocation2]] %s0
  $region1: #{deterministic_decoder.1} parent=0
    #allocation3 [shape = 'u8[4096]{0}', space=vmem, size = 0x1000, scoped, tag = 'input window, operand 1, single buffered']
    #allocation4 [shape = 's32[1]{0}', space=sflag, size = 0x4, scoped, tag = 'scoped memory for deterministic_decoder.1']
    #allocation5 [shape = 's32[1]{0}', space=sflag, size = 0x4, scoped, tag = 'scoped memory for deterministic_decoder.1']
    #allocation6 [shape = 'u8[71680]{0}', space=vmem, size = 0x11800, scoped, tag = 'input window, operand 2, single buffered']
    #allocation7 [shape = 's32[1]{0}', space=sflag, size = 0x4, scoped, tag = 'scoped memory for deterministic_decoder.1']
    #allocation8 [shape = 'u8[229376]{0}', space=vmem, size = 0x38000, scoped, tag = 'input window, operand 3, single buffered']
    #allocation9 [shape = 'u8[4096]{0}', space=vmem, size = 0x1000, scoped, tag = 'output window, operand 0, single buffered']
    %11 = vsyncpa [#allocation4], 0
    %12 = vsyncpa [#allocation7], 0
    %13 = vsyncpa [#allocation5], 0
    // Predicated region
    $region2: #{deterministic_decoder.1} parent=1 // pred_check
      _
    $region3: #{deterministic_decoder.1} parent=1 // pred_check_branch
      %15 = sbr.rel (0) target = $region5
    $region4: #{deterministic_decoder.1} parent=1 // pred_region
      _
    $region5: #{deterministic_decoder.1} parent=1 // pred_fallthru
      _
    // Predicated region
    $region6: #{deterministic_decoder.1} parent=1 // pred_check
      _
    $region7: #{deterministic_decoder.1} parent=1 // pred_check_branch
      %17 = sbr.rel (0) target = $region9
    $region8: #{deterministic_decoder.1} parent=1 // pred_region
      %s19 = ssub.s32 128, 128
      %20 = vsyncadd [#allocation4], %s19
      %s22 = sshll.u32 [#allocation3], 4
      %s23 = int_to_ptr.vmem [resolvable:$true] %s22
      %25 = dma.hbm_to_vmem [thread:$0]  %s1, 128, %s23, [#allocation4]
    $region9: #{deterministic_decoder.1} parent=1 // pred_fallthru
      _
    // Predicated region
    $region10: #{deterministic_decoder.1} parent=1 // pred_check
      _
    $region11: #{deterministic_decoder.1} parent=1 // pred_check_branch
      %27 = sbr.rel (0) target = $region13
    $region12: #{deterministic_decoder.1} parent=1 // pred_region
      %s29 = ssub.s32 2240, 2240
      %30 = vsyncadd [#allocation7], %s29
      %s31 = sshll.u32 [#allocation6], 4
      %s32 = int_to_ptr.vmem [resolvable:$true] %s31
      %37 = dma.hbm_to_vmem [thread:$0]  %s2, 2240, %s32, [#allocation7], 448, 448, 28
    $region13: #{deterministic_decoder.1} parent=1 // pred_fallthru
      _
    // Predicated region
    $region14: #{deterministic_decoder.1} parent=1 // pred_check
      _
    $region15: #{deterministic_decoder.1} parent=1 // pred_check_branch
      %39 = sbr.rel (0) target = $region17
    $region16: #{deterministic_decoder.1} parent=1 // pred_region
      %s41 = ssub.s32 7168, 7168
      %42 = vsyncadd [#allocation7], %s41
      %s43 = sshll.u32 [#allocation8], 4
      %s44 = int_to_ptr.vmem [resolvable:$true] %s43
      %49 = dma.hbm_to_vmem [thread:$0]  %s3, 7168, %s44, [#allocation7], 64, 64, 4
    $region17: #{deterministic_decoder.1} parent=1 // pred_fallthru
      _
    // Predicated region
    $region18: #{deterministic_decoder.1} parent=1 // pred_check
      _
    $region19: #{deterministic_decoder.1} parent=1 // pred_check_branch
      %51 = sbr.rel (0) target = $region21
    $region20: #{deterministic_decoder.1} parent=1 // pred_region
      _
    $region21: #{deterministic_decoder.1} parent=1 // pred_fallthru
      _
    // Predicated region
    $region22: #{deterministic_decoder.1} parent=1 // pred_check
      _
    $region23: #{deterministic_decoder.1} parent=1 // pred_check_branch
      %53 = sbr.rel (0) target = $region25
    $region24: #{deterministic_decoder.1} parent=1 // pred_region
      %54 = dma.done [#allocation4], 128
    $region25: #{deterministic_decoder.1} parent=1 // pred_fallthru
      _
    // Predicated region
    $region26: #{deterministic_decoder.1} parent=1 // pred_check
      _
    $region27: #{deterministic_decoder.1} parent=1 // pred_check_branch
      %56 = sbr.rel (0) target = $region29
    $region28: #{deterministic_decoder.1} parent=1 // pred_region
      %57 = dma.done [#allocation7], 2240
    $region29: #{deterministic_decoder.1} parent=1 // pred_fallthru
      _
    // Predicated region
    $region30: #{deterministic_decoder.1} parent=1 // pred_check
      _
    $region31: #{deterministic_decoder.1} parent=1 // pred_check_branch
      %59 = sbr.rel (0) target = $region33
    $region32: #{deterministic_decoder.1} parent=1 // pred_region
      %60 = dma.done [#allocation7], 7168
    $region33: #{deterministic_decoder.1} parent=1 // pred_fallthru
      _
    %s63 = sld [smem:[#allocation2]]
    %v64 = vld [vmem:[#allocation3] sm:$0xff]
    %v65 = vstv %s63
    %v66 = vmul.f32 %v64, %v65
    %v67 = vpack.c.bf16 %v66, %v66
    %vm68 = vcmask 261120
    %v71 = vsel %vm68, %v67, 1065369472
    %v72 = vld [vmem:[#allocation6] sm:$0xff]
    %v73 = vld [vmem:[#allocation6 + $0x8] sm:$0xff]
    %v74 = vld [vmem:[#allocation6 + $0x10] sm:$0xff]
    %v75 = vld [vmem:[#allocation6 + $0x18] sm:$0xf]
    %v76 = vld [vmem:[#allocation6 + $0x1c] sm:$0xff]
    %v77 = vld [vmem:[#allocation6 + $0x24] sm:$0xff]
    %v78 = vld [vmem:[#allocation6 + $0x2c] sm:$0xff]
    %v79 = vld [vmem:[#allocation6 + $0x34] sm:$0xf]
    %v80 = vld [vmem:[#allocation6 + $0x38] sm:$0xff]
    %v81 = vld [vmem:[#allocation6 + $0x40] sm:$0xff]
    %v82 = vld [vmem:[#allocation6 + $0x48] sm:$0xff]
    %v83 = vld [vmem:[#allocation6 + $0x50] sm:$0xf]
    %v84 = vld [vmem:[#allocation6 + $0x54] sm:$0xff]
    %v85 = vld [vmem:[#allocation6 + $0x5c] sm:$0xff]
    %v86 = vld [vmem:[#allocation6 + $0x64] sm:$0xff]
    %v87 = vld [vmem:[#allocation6 + $0x6c] sm:$0xf]
    %v88 = vld [vmem:[#allocation6 + $0x70] sm:$0x11]
    %v89 = vld [vmem:[#allocation6 + $0x78] sm:$0x11]
    %v90 = vld [vmem:[#allocation6 + $0x80] sm:$0x11]
    %v91 = vld [vmem:[#allocation6 + $0x88] sm:$0x1]
    %v112 = vunpack.c.l.b16 %v72
    %v113 = vunpack.c.h.b16 %v72
    %v114 = vunpack.c.l.b16 %v73
    %v115 = vunpack.c.h.b16 %v73
    %v116 = vunpack.c.l.b16 %v74
    %v117 = vunpack.c.h.b16 %v74
    %v118 = vunpack.c.l.b16 %v75
    %v119 = vunpack.c.l.b16 %v76
    %v120 = vunpack.c.h.b16 %v76
    %v121 = vunpack.c.l.b16 %v77
    %v122 = vunpack.c.h.b16 %v77
    %v123 = vunpack.c.l.b16 %v78
    %v124 = vunpack.c.h.b16 %v78
    %v125 = vunpack.c.l.b16 %v79
    %v126 = vunpack.c.l.b16 %v80
    %v127 = vunpack.c.h.b16 %v80
    %v128 = vunpack.c.l.b16 %v81
    %v129 = vunpack.c.h.b16 %v81
    %v130 = vunpack.c.l.b16 %v82
    %v131 = vunpack.c.h.b16 %v82
    %v132 = vunpack.c.l.b16 %v83
    %v133 = vunpack.c.l.b16 %v84
    %v134 = vunpack.c.h.b16 %v84
    %v135 = vunpack.c.l.b16 %v85
    %v136 = vunpack.c.h.b16 %v85
    %v137 = vunpack.c.l.b16 %v86
    %v138 = vunpack.c.h.b16 %v86
    %v139 = vunpack.c.l.b16 %v87
    %v140 = vunpack.c.l.b16 %v88
    %v141 = vunpack.c.h.b16 %v88
    %v142 = vunpack.c.l.b16 %v89
    %v143 = vunpack.c.h.b16 %v89
    %v144 = vunpack.c.l.b16 %v90
    %v145 = vunpack.c.h.b16 %v90
    %v146 = vunpack.c.l.b16 %v91
    %v147 = vpack.c.b16 %v119, %v112
    %v148 = vpack.c.b16 %v120, %v113
    %v149 = vpack.c.b16 %v121, %v114
    %v150 = vpack.c.b16 %v122, %v115
    %v151 = vpack.c.b16 %v123, %v116
    %v152 = vpack.c.b16 %v124, %v117
    %v153 = vpack.c.b16 %v125, %v118
    %v154 = vpack.c.b16 %v133, %v126
    %v155 = vpack.c.b16 %v134, %v127
    %v156 = vpack.c.b16 %v135, %v128
    %v157 = vpack.c.b16 %v136, %v129
    %v158 = vpack.c.b16 %v137, %v130
    %v159 = vpack.c.b16 %v138, %v131
    %v160 = vpack.c.b16 %v139, %v132
    %v161 = vpack.c.b16 %v140, %v140
    %v162 = vpack.c.b16 %v141, %v141
    %v163 = vpack.c.b16 %v142, %v142
    %v164 = vpack.c.b16 %v143, %v143
    %v165 = vpack.c.b16 %v144, %v144
    %v166 = vpack.c.b16 %v145, %v145
    %v167 = vpack.c.b16 %v146, %v146
    %vm182 = vcmask 269312
    %v183 = vsel %vm182, %v71, 0
    %vm185 = vcmask 1040384
    %v186 = vsel 0, 4294967295, 65535
    %v187 = vsel %vm185, %v186, 0
    %v189 = vand.u32 %v161, %v187
    %v192 = vand.u32 %v162, %v187
    %v195 = vand.u32 %v163, %v187
    %v198 = vand.u32 %v164, %v187
    %v201 = vand.u32 %v165, %v187
    %v204 = vand.u32 %v166, %v187
    %v207 = vand.u32 %v167, %v187
    %209 = vmatprep.subr.bf16.mxu0 0
    %210 = vmatpush1.bf16.msra.mxu0 0
    %211 = vmatprep.subr.bf16.mxu0 0
    %212 = vmatpush1.bf16.msra.mxu0 0
    %213 = vmatprep.subr.bf16.mxu0 0
    %214 = vmatpush1.bf16.msra.mxu0 0
    %215 = vmatprep.subr.bf16.mxu0 0
    %216 = vmatpush1.bf16.msra.mxu0 0
    %217 = vmatprep.subr.bf16.mxu0 0
    %218 = vmatpush1.bf16.msra.mxu0 0
    %219 = vmatprep.subr.bf16.mxu0 %v192
    %220 = vmatpush1.bf16.msra.mxu0 %v189
    %221 = vmatprep.subr.bf16.mxu0 %v155
    %222 = vmatpush1.bf16.msra.mxu0 %v154
    %223 = vmatprep.subr.bf16.mxu0 %v148
    %224 = vmatpush1.bf16.msra.mxu0 %v147
    %225 = vmatprep.subr.bf16.mxu0 0
    %226 = vmatpush2.bf16.msra.mxu0 0
    %227 = vmatprep.subr.bf16.mxu0 0
    %228 = vmatpush2.bf16.msra.mxu0 0
    %229 = vmatprep.subr.bf16.mxu0 0
    %230 = vmatpush2.bf16.msra.mxu0 0
    %231 = vmatprep.subr.bf16.mxu0 0
    %232 = vmatpush2.bf16.msra.mxu0 0
    %233 = vmatprep.subr.bf16.mxu0 0
    %234 = vmatpush2.bf16.msra.mxu0 0
    %235 = vmatprep.subr.bf16.mxu0 0
    %236 = vmatpush2.bf16.msra.mxu0 0
    %237 = vmatprep.subr.bf16.mxu0 0
    %238 = vmatpush2.bf16.msra.mxu0 0
    %239 = vmatprep.subr.bf16.mxu0 0
    %240 = vmatpush2.bf16.msra.mxu0 0
    %241 = vmatprep.mubr.bf16.mxu0 0
    %242 = vmatmul.mubr.bf16.gmra.mxu0 %v183
    %v243 = vpop.f32.mrf.mxu0
    %v244 = vadd.f32 0.0, %v243
    %v245 = vpop.f32.mrf.mxu0
    %v246 = vadd.f32 0.0, %v245
    %v247 = vpop.f32.mrf.mxu0
    %v248 = vpop.f32.mrf.mxu0
    %249 = vdwg.mxu0
    %250 = vmatprep.subr.bf16.mxu0 0
    %251 = vmatpush1.bf16.msra.mxu0 0
    %252 = vmatprep.subr.bf16.mxu0 0
    %253 = vmatpush1.bf16.msra.mxu0 0
    %254 = vmatprep.subr.bf16.mxu0 0
    %255 = vmatpush1.bf16.msra.mxu0 0
    %256 = vmatprep.subr.bf16.mxu0 0
    %257 = vmatpush1.bf16.msra.mxu0 0
    %258 = vmatprep.subr.bf16.mxu0 0
    %259 = vmatpush1.bf16.msra.mxu0 0
    %260 = vmatprep.subr.bf16.mxu0 %v198
    %261 = vmatpush1.bf16.msra.mxu0 %v195
    %262 = vmatprep.subr.bf16.mxu0 %v157
    %263 = vmatpush1.bf16.msra.mxu0 %v156
    %264 = vmatprep.subr.bf16.mxu0 %v150
    %265 = vmatpush1.bf16.msra.mxu0 %v149
    %266 = vmatprep.subr.bf16.mxu0 0
    %267 = vmatpush2.bf16.msra.mxu0 0
    %268 = vmatprep.subr.bf16.mxu0 0
    %269 = vmatpush2.bf16.msra.mxu0 0
    %270 = vmatprep.subr.bf16.mxu0 0
    %271 = vmatpush2.bf16.msra.mxu0 0
    %272 = vmatprep.subr.bf16.mxu0 0
    %273 = vmatpush2.bf16.msra.mxu0 0
    %274 = vmatprep.subr.bf16.mxu0 0
    %275 = vmatpush2.bf16.msra.mxu0 0
    %276 = vmatprep.subr.bf16.mxu0 0
    %277 = vmatpush2.bf16.msra.mxu0 0
    %278 = vmatprep.subr.bf16.mxu0 0
    %279 = vmatpush2.bf16.msra.mxu0 0
    %280 = vmatprep.subr.bf16.mxu0 0
    %281 = vmatpush2.bf16.msra.mxu0 0
    %282 = vmatprep.mubr.bf16.mxu0 0
    %283 = vmatmul.mubr.bf16.gmra.mxu0 %v183
    %v284 = vpop.f32.mrf.mxu0
    %v285 = vadd.f32 0.0, %v284
    %v286 = vpop.f32.mrf.mxu0
    %v287 = vadd.f32 0.0, %v286
    %v288 = vpop.f32.mrf.mxu0
    %v289 = vpop.f32.mrf.mxu0
    %290 = vdwg.mxu0
    %291 = vmatprep.subr.bf16.mxu0 0
    %292 = vmatpush1.bf16.msra.mxu0 0
    %293 = vmatprep.subr.bf16.mxu0 0
    %294 = vmatpush1.bf16.msra.mxu0 0
    %295 = vmatprep.subr.bf16.mxu0 0
    %296 = vmatpush1.bf16.msra.mxu0 0
    %297 = vmatprep.subr.bf16.mxu0 0
    %298 = vmatpush1.bf16.msra.mxu0 0
    %299 = vmatprep.subr.bf16.mxu0 0
    %300 = vmatpush1.bf16.msra.mxu0 0
    %301 = vmatprep.subr.bf16.mxu0 %v204
    %302 = vmatpush1.bf16.msra.mxu0 %v201
    %303 = vmatprep.subr.bf16.mxu0 %v159
    %304 = vmatpush1.bf16.msra.mxu0 %v158
    %305 = vmatprep.subr.bf16.mxu0 %v152
    %306 = vmatpush1.bf16.msra.mxu0 %v151
    %307 = vmatprep.subr.bf16.mxu0 0
    %308 = vmatpush2.bf16.msra.mxu0 0
    %309 = vmatprep.subr.bf16.mxu0 0
    %310 = vmatpush2.bf16.msra.mxu0 0
    %311 = vmatprep.subr.bf16.mxu0 0
    %312 = vmatpush2.bf16.msra.mxu0 0
    %313 = vmatprep.subr.bf16.mxu0 0
    %314 = vmatpush2.bf16.msra.mxu0 0
    %315 = vmatprep.subr.bf16.mxu0 0
    %316 = vmatpush2.bf16.msra.mxu0 0
    %317 = vmatprep.subr.bf16.mxu0 0
    %318 = vmatpush2.bf16.msra.mxu0 0
    %319 = vmatprep.subr.bf16.mxu0 0
    %320 = vmatpush2.bf16.msra.mxu0 0
    %321 = vmatprep.subr.bf16.mxu0 0
    %322 = vmatpush2.bf16.msra.mxu0 0
    %323 = vmatprep.mubr.bf16.mxu0 0
    %324 = vmatmul.mubr.bf16.gmra.mxu0 %v183
    %v325 = vpop.f32.mrf.mxu0
    %v326 = vadd.f32 0.0, %v325
    %v327 = vpop.f32.mrf.mxu0
    %v328 = vadd.f32 0.0, %v327
    %v329 = vpop.f32.mrf.mxu0
    %v330 = vpop.f32.mrf.mxu0
    %331 = vdwg.mxu0
    %332 = vmatprep.subr.bf16.mxu0 0
    %333 = vmatpush1.bf16.msra.mxu0 0
    %334 = vmatprep.subr.bf16.mxu0 0
    %335 = vmatpush1.bf16.msra.mxu0 0
    %336 = vmatprep.subr.bf16.mxu0 0
    %337 = vmatpush1.bf16.msra.mxu0 0
    %338 = vmatprep.subr.bf16.mxu0 0
    %339 = vmatpush1.bf16.msra.mxu0 0
    %340 = vmatprep.subr.bf16.mxu0 0
    %341 = vmatpush1.bf16.msra.mxu0 0
    %342 = vmatprep.subr.bf16.mxu0 0
    %343 = vmatpush1.bf16.msra.mxu0 %v207
    %344 = vmatprep.subr.bf16.mxu0 0
    %345 = vmatpush1.bf16.msra.mxu0 %v160
    %346 = vmatprep.subr.bf16.mxu0 0
    %347 = vmatpush1.bf16.msra.mxu0 %v153
    %348 = vmatprep.subr.bf16.mxu0 0
    %349 = vmatpush2.bf16.msra.mxu0 0
    %350 = vmatprep.subr.bf16.mxu0 0
    %351 = vmatpush2.bf16.msra.mxu0 0
    %352 = vmatprep.subr.bf16.mxu0 0
    %353 = vmatpush2.bf16.msra.mxu0 0
    %354 = vmatprep.subr.bf16.mxu0 0
    %355 = vmatpush2.bf16.msra.mxu0 0
    %356 = vmatprep.subr.bf16.mxu0 0
    %357 = vmatpush2.bf16.msra.mxu0 0
    %358 = vmatprep.subr.bf16.mxu0 0
    %359 = vmatpush2.bf16.msra.mxu0 0
    %360 = vmatprep.subr.bf16.mxu0 0
    %361 = vmatpush2.bf16.msra.mxu0 0
    %362 = vmatprep.subr.bf16.mxu0 0
    %363 = vmatpush2.bf16.msra.mxu0 0
    %364 = vmatprep.mubr.bf16.mxu0 0
    %365 = vmatmul.mubr.bf16.gmra.mxu0 %v183
    %v366 = vpop.f32.mrf.mxu0
    %v367 = vadd.f32 0.0, %v366
    %v368 = vpop.f32.mrf.mxu0
    %v369 = vpop.f32.mrf.mxu0
    %v370 = vpop.f32.mrf.mxu0
    %371 = vdwg.mxu0
    %v372 = vpack.c.bf16 %v244, %v244
    %v373 = vpack.c.bf16 %v246, %v246
    %v374 = vpack.c.bf16 %v285, %v285
    %v375 = vpack.c.bf16 %v287, %v287
    %v376 = vpack.c.bf16 %v326, %v326
    %v377 = vpack.c.bf16 %v328, %v328
    %v378 = vpack.c.bf16 %v367, %v367
    %v379 = vmax.bf16 %v372, 0
    %v380 = vmax.bf16 %v373, 0
    %v381 = vmax.bf16 %v374, 0
    %v382 = vmax.bf16 %v375, 0
    %v383 = vmax.bf16 %v376, 0
    %v384 = vmax.bf16 %v377, 0
    %v385 = vmax.bf16 %v378, 0
    %v386 = vld [vmem:[#allocation8] sm:$0xf]
    %v387 = vld [vmem:[#allocation8 + $0x4] sm:$0xf]
    %v388 = vld [vmem:[#allocation8 + $0x8] sm:$0xf]
    %v389 = vld [vmem:[#allocation8 + $0xc] sm:$0xf]
    %v390 = vld [vmem:[#allocation8 + $0x10] sm:$0xf]
    %v391 = vld [vmem:[#allocation8 + $0x14] sm:$0xf]
    %v392 = vld [vmem:[#allocation8 + $0x18] sm:$0xf]
    %v393 = vld [vmem:[#allocation8 + $0x1c] sm:$0xf]
    %v394 = vld [vmem:[#allocation8 + $0x20] sm:$0xf]
    %v395 = vld [vmem:[#allocation8 + $0x24] sm:$0xf]
    %v396 = vld [vmem:[#allocation8 + $0x28] sm:$0xf]
    %v397 = vld [vmem:[#allocation8 + $0x2c] sm:$0xf]
    %v398 = vld [vmem:[#allocation8 + $0x30] sm:$0xf]
    %v399 = vld [vmem:[#allocation8 + $0x34] sm:$0xf]
    %v400 = vld [vmem:[#allocation8 + $0x38] sm:$0xf]
    %v401 = vld [vmem:[#allocation8 + $0x3c] sm:$0xf]
    %v402 = vld [vmem:[#allocation8 + $0x40] sm:$0xf]
    %v403 = vld [vmem:[#allocation8 + $0x44] sm:$0xf]
    %v404 = vld [vmem:[#allocation8 + $0x48] sm:$0xf]
    %v405 = vld [vmem:[#allocation8 + $0x4c] sm:$0xf]
    %v406 = vld [vmem:[#allocation8 + $0x50] sm:$0xf]
    %v407 = vld [vmem:[#allocation8 + $0x54] sm:$0xf]
    %v408 = vld [vmem:[#allocation8 + $0x58] sm:$0xf]
    %v409 = vld [vmem:[#allocation8 + $0x5c] sm:$0xf]
    %v410 = vld [vmem:[#allocation8 + $0x60] sm:$0xf]
    %v411 = vld [vmem:[#allocation8 + $0x64] sm:$0xf]
    %v412 = vld [vmem:[#allocation8 + $0x68] sm:$0xf]
    %v413 = vld [vmem:[#allocation8 + $0x6c] sm:$0xf]
    %v414 = vld [vmem:[#allocation8 + $0x70] sm:$0xf]
    %v415 = vld [vmem:[#allocation8 + $0x74] sm:$0xf]
    %v416 = vld [vmem:[#allocation8 + $0x78] sm:$0xf]
    %v417 = vld [vmem:[#allocation8 + $0x7c] sm:$0xf]
    %v418 = vld [vmem:[#allocation8 + $0x80] sm:$0xf]
    %v419 = vld [vmem:[#allocation8 + $0x84] sm:$0xf]
    %v420 = vld [vmem:[#allocation8 + $0x88] sm:$0xf]
    %v421 = vld [vmem:[#allocation8 + $0x8c] sm:$0xf]
    %v422 = vld [vmem:[#allocation8 + $0x90] sm:$0xf]
    %v423 = vld [vmem:[#allocation8 + $0x94] sm:$0xf]
    %v424 = vld [vmem:[#allocation8 + $0x98] sm:$0xf]
    %v425 = vld [vmem:[#allocation8 + $0x9c] sm:$0xf]
    %v426 = vld [vmem:[#allocation8 + $0xa0] sm:$0xf]
    %v427 = vld [vmem:[#allocation8 + $0xa4] sm:$0xf]
    %v428 = vld [vmem:[#allocation8 + $0xa8] sm:$0xf]
    %v429 = vld [vmem:[#allocation8 + $0xac] sm:$0xf]
    %v430 = vld [vmem:[#allocation8 + $0xb0] sm:$0xf]
    %v431 = vld [vmem:[#allocation8 + $0xb4] sm:$0xf]
    %v432 = vld [vmem:[#allocation8 + $0xb8] sm:$0xf]
    %v433 = vld [vmem:[#allocation8 + $0xbc] sm:$0xf]
    %v434 = vld [vmem:[#allocation8 + $0xc0] sm:$0xf]
    %v435 = vld [vmem:[#allocation8 + $0xc4] sm:$0xf]
    %v436 = vld [vmem:[#allocation8 + $0xc8] sm:$0xf]
    %v437 = vld [vmem:[#allocation8 + $0xcc] sm:$0xf]
    %v438 = vld [vmem:[#allocation8 + $0xd0] sm:$0xf]
    %v439 = vld [vmem:[#allocation8 + $0xd4] sm:$0xf]
    %v440 = vld [vmem:[#allocation8 + $0xd8] sm:$0xf]
    %v441 = vld [vmem:[#allocation8 + $0xdc] sm:$0xf]
    %v442 = vld [vmem:[#allocation8 + $0xe0] sm:$0xf]
    %v443 = vld [vmem:[#allocation8 + $0xe4] sm:$0xf]
    %v444 = vld [vmem:[#allocation8 + $0xe8] sm:$0xf]
    %v445 = vld [vmem:[#allocation8 + $0xec] sm:$0xf]
    %v446 = vld [vmem:[#allocation8 + $0xf0] sm:$0xf]
    %v447 = vld [vmem:[#allocation8 + $0xf4] sm:$0xf]
    %v448 = vld [vmem:[#allocation8 + $0xf8] sm:$0xf]
    %v449 = vld [vmem:[#allocation8 + $0xfc] sm:$0xf]
    %v450 = vld [vmem:[#allocation8 + $0x100] sm:$0xf]
    %v451 = vld [vmem:[#allocation8 + $0x104] sm:$0xf]
    %v452 = vld [vmem:[#allocation8 + $0x108] sm:$0xf]
    %v453 = vld [vmem:[#allocation8 + $0x10c] sm:$0xf]
    %v454 = vld [vmem:[#allocation8 + $0x110] sm:$0xf]
    %v455 = vld [vmem:[#allocation8 + $0x114] sm:$0xf]
    %v456 = vld [vmem:[#allocation8 + $0x118] sm:$0xf]
    %v457 = vld [vmem:[#allocation8 + $0x11c] sm:$0xf]
    %v458 = vld [vmem:[#allocation8 + $0x120] sm:$0xf]
    %v459 = vld [vmem:[#allocation8 + $0x124] sm:$0xf]
    %v460 = vld [vmem:[#allocation8 + $0x128] sm:$0xf]
    %v461 = vld [vmem:[#allocation8 + $0x12c] sm:$0xf]
    %v462 = vld [vmem:[#allocation8 + $0x130] sm:$0xf]
    %v463 = vld [vmem:[#allocation8 + $0x134] sm:$0xf]
    %v464 = vld [vmem:[#allocation8 + $0x138] sm:$0xf]
    %v465 = vld [vmem:[#allocation8 + $0x13c] sm:$0xf]
    %v466 = vld [vmem:[#allocation8 + $0x140] sm:$0xf]
    %v467 = vld [vmem:[#allocation8 + $0x144] sm:$0xf]
    %v468 = vld [vmem:[#allocation8 + $0x148] sm:$0xf]
    %v469 = vld [vmem:[#allocation8 + $0x14c] sm:$0xf]
    %v470 = vld [vmem:[#allocation8 + $0x150] sm:$0xf]
    %v471 = vld [vmem:[#allocation8 + $0x154] sm:$0xf]
    %v472 = vld [vmem:[#allocation8 + $0x158] sm:$0xf]
    %v473 = vld [vmem:[#allocation8 + $0x15c] sm:$0xf]
    %v474 = vld [vmem:[#allocation8 + $0x160] sm:$0xf]
    %v475 = vld [vmem:[#allocation8 + $0x164] sm:$0xf]
    %v476 = vld [vmem:[#allocation8 + $0x168] sm:$0xf]
    %v477 = vld [vmem:[#allocation8 + $0x16c] sm:$0xf]
    %v478 = vld [vmem:[#allocation8 + $0x170] sm:$0xf]
    %v479 = vld [vmem:[#allocation8 + $0x174] sm:$0xf]
    %v480 = vld [vmem:[#allocation8 + $0x178] sm:$0xf]
    %v481 = vld [vmem:[#allocation8 + $0x17c] sm:$0xf]
    %v482 = vld [vmem:[#allocation8 + $0x180] sm:$0xf]
    %v483 = vld [vmem:[#allocation8 + $0x184] sm:$0xf]
    %v484 = vld [vmem:[#allocation8 + $0x188] sm:$0xf]
    %v485 = vld [vmem:[#allocation8 + $0x18c] sm:$0xf]
    %v486 = vld [vmem:[#allocation8 + $0x190] sm:$0xf]
    %v487 = vld [vmem:[#allocation8 + $0x194] sm:$0xf]
    %v488 = vld [vmem:[#allocation8 + $0x198] sm:$0xf]
    %v489 = vld [vmem:[#allocation8 + $0x19c] sm:$0xf]
    %v490 = vld [vmem:[#allocation8 + $0x1a0] sm:$0xf]
    %v491 = vld [vmem:[#allocation8 + $0x1a4] sm:$0xf]
    %v492 = vld [vmem:[#allocation8 + $0x1a8] sm:$0xf]
    %v493 = vld [vmem:[#allocation8 + $0x1ac] sm:$0xf]
    %v494 = vld [vmem:[#allocation8 + $0x1b0] sm:$0xf]
    %v495 = vld [vmem:[#allocation8 + $0x1b4] sm:$0xf]
    %v496 = vld [vmem:[#allocation8 + $0x1b8] sm:$0xf]
    %v497 = vld [vmem:[#allocation8 + $0x1bc] sm:$0xf]
    %v498 = vld [vmem:[%s4] sm:$0x1]
    %v500 = vlaneseq
    %v501 = vshrl.u32 %v500, 7
    %v502 = vsub.s32 0, %v501
    %v503 = vrot.slane %v498, %v502
    %v617 = vunpack.c.l.b16 %v386
    %v618 = vunpack.c.l.b16 %v387
    %v619 = vunpack.c.l.b16 %v388
    %v620 = vunpack.c.l.b16 %v389
    %v621 = vunpack.c.l.b16 %v390
    %v622 = vunpack.c.l.b16 %v391
    %v623 = vunpack.c.l.b16 %v392
    %v624 = vunpack.c.l.b16 %v393
    %v625 = vunpack.c.l.b16 %v394
    %v626 = vunpack.c.l.b16 %v395
    %v627 = vunpack.c.l.b16 %v396
    %v628 = vunpack.c.l.b16 %v397
    %v629 = vunpack.c.l.b16 %v398
    %v630 = vunpack.c.l.b16 %v399
    %v631 = vunpack.c.l.b16 %v400
    %v632 = vunpack.c.l.b16 %v401
    %v633 = vunpack.c.l.b16 %v402
    %v634 = vunpack.c.l.b16 %v403
    %v635 = vunpack.c.l.b16 %v404
    %v636 = vunpack.c.l.b16 %v405
    %v637 = vunpack.c.l.b16 %v406
    %v638 = vunpack.c.l.b16 %v407
    %v639 = vunpack.c.l.b16 %v408
    %v640 = vunpack.c.l.b16 %v409
    %v641 = vunpack.c.l.b16 %v410
    %v642 = vunpack.c.l.b16 %v411
    %v643 = vunpack.c.l.b16 %v412
    %v644 = vunpack.c.l.b16 %v413
    %v645 = vunpack.c.l.b16 %v414
    %v646 = vunpack.c.l.b16 %v415
    %v647 = vunpack.c.l.b16 %v416
    %v648 = vunpack.c.l.b16 %v417
    %v649 = vunpack.c.l.b16 %v418
    %v650 = vunpack.c.l.b16 %v419
    %v651 = vunpack.c.l.b16 %v420
    %v652 = vunpack.c.l.b16 %v421
    %v653 = vunpack.c.l.b16 %v422
    %v654 = vunpack.c.l.b16 %v423
    %v655 = vunpack.c.l.b16 %v424
    %v656 = vunpack.c.l.b16 %v425
    %v657 = vunpack.c.l.b16 %v426
    %v658 = vunpack.c.l.b16 %v427
    %v659 = vunpack.c.l.b16 %v428
    %v660 = vunpack.c.l.b16 %v429
    %v661 = vunpack.c.l.b16 %v430
    %v662 = vunpack.c.l.b16 %v431
    %v663 = vunpack.c.l.b16 %v432
    %v664 = vunpack.c.l.b16 %v433
    %v665 = vunpack.c.l.b16 %v434
    %v666 = vunpack.c.l.b16 %v435
    %v667 = vunpack.c.l.b16 %v436
    %v668 = vunpack.c.l.b16 %v437
    %v669 = vunpack.c.l.b16 %v438
    %v670 = vunpack.c.l.b16 %v439
    %v671 = vunpack.c.l.b16 %v440
    %v672 = vunpack.c.l.b16 %v441
    %v673 = vunpack.c.l.b16 %v442
    %v674 = vunpack.c.l.b16 %v443
    %v675 = vunpack.c.l.b16 %v444
    %v676 = vunpack.c.l.b16 %v445
    %v677 = vunpack.c.l.b16 %v446
    %v678 = vunpack.c.l.b16 %v447
    %v679 = vunpack.c.l.b16 %v448
    %v680 = vunpack.c.l.b16 %v449
    %v681 = vunpack.c.l.b16 %v450
    %v682 = vunpack.c.l.b16 %v451
    %v683 = vunpack.c.l.b16 %v452
    %v684 = vunpack.c.l.b16 %v453
    %v685 = vunpack.c.l.b16 %v454
    %v686 = vunpack.c.l.b16 %v455
    %v687 = vunpack.c.l.b16 %v456
    %v688 = vunpack.c.l.b16 %v457
    %v689 = vunpack.c.l.b16 %v458
    %v690 = vunpack.c.l.b16 %v459
    %v691 = vunpack.c.l.b16 %v460
    %v692 = vunpack.c.l.b16 %v461
    %v693 = vunpack.c.l.b16 %v462
    %v694 = vunpack.c.l.b16 %v463
    %v695 = vunpack.c.l.b16 %v464
    %v696 = vunpack.c.l.b16 %v465
    %v697 = vunpack.c.l.b16 %v466
    %v698 = vunpack.c.l.b16 %v467
    %v699 = vunpack.c.l.b16 %v468
    %v700 = vunpack.c.l.b16 %v469
    %v701 = vunpack.c.l.b16 %v470
    %v702 = vunpack.c.l.b16 %v471
    %v703 = vunpack.c.l.b16 %v472
    %v704 = vunpack.c.l.b16 %v473
    %v705 = vunpack.c.l.b16 %v474
    %v706 = vunpack.c.l.b16 %v475
    %v707 = vunpack.c.l.b16 %v476
    %v708 = vunpack.c.l.b16 %v477
    %v709 = vunpack.c.l.b16 %v478
    %v710 = vunpack.c.l.b16 %v479
    %v711 = vunpack.c.l.b16 %v480
    %v712 = vunpack.c.l.b16 %v481
    %v713 = vunpack.c.l.b16 %v482
    %v714 = vunpack.c.l.b16 %v483
    %v715 = vunpack.c.l.b16 %v484
    %v716 = vunpack.c.l.b16 %v485
    %v717 = vunpack.c.l.b16 %v486
    %v718 = vunpack.c.l.b16 %v487
    %v719 = vunpack.c.l.b16 %v488
    %v720 = vunpack.c.l.b16 %v489
    %v721 = vunpack.c.l.b16 %v490
    %v722 = vunpack.c.l.b16 %v491
    %v723 = vunpack.c.l.b16 %v492
    %v724 = vunpack.c.l.b16 %v493
    %v725 = vunpack.c.l.b16 %v494
    %v726 = vunpack.c.l.b16 %v495
    %v727 = vunpack.c.l.b16 %v496
    %v728 = vunpack.c.l.b16 %v497
    %v729 = vpack.c.b16 %v618, %v617
    %v730 = vpack.c.b16 %v620, %v619
    %v731 = vpack.c.b16 %v622, %v621
    %v732 = vpack.c.b16 %v624, %v623
    %v733 = vpack.c.b16 %v626, %v625
    %v734 = vpack.c.b16 %v628, %v627
    %v735 = vpack.c.b16 %v630, %v629
    %v736 = vpack.c.b16 %v632, %v631
    %v737 = vpack.c.b16 %v634, %v633
    %v738 = vpack.c.b16 %v636, %v635
    %v739 = vpack.c.b16 %v638, %v637
    %v740 = vpack.c.b16 %v640, %v639
    %v741 = vpack.c.b16 %v642, %v641
    %v742 = vpack.c.b16 %v644, %v643
    %v743 = vpack.c.b16 %v646, %v645
    %v744 = vpack.c.b16 %v648, %v647
    %v745 = vpack.c.b16 %v650, %v649
    %v746 = vpack.c.b16 %v652, %v651
    %v747 = vpack.c.b16 %v654, %v653
    %v748 = vpack.c.b16 %v656, %v655
    %v749 = vpack.c.b16 %v658, %v657
    %v750 = vpack.c.b16 %v660, %v659
    %v751 = vpack.c.b16 %v662, %v661
    %v752 = vpack.c.b16 %v664, %v663
    %v753 = vpack.c.b16 %v666, %v665
    %v754 = vpack.c.b16 %v668, %v667
    %v755 = vpack.c.b16 %v670, %v669
    %v756 = vpack.c.b16 %v672, %v671
    %v757 = vpack.c.b16 %v674, %v673
    %v758 = vpack.c.b16 %v676, %v675
    %v759 = vpack.c.b16 %v678, %v677
    %v760 = vpack.c.b16 %v680, %v679
    %v761 = vpack.c.b16 %v682, %v681
    %v762 = vpack.c.b16 %v684, %v683
    %v763 = vpack.c.b16 %v686, %v685
    %v764 = vpack.c.b16 %v688, %v687
    %v765 = vpack.c.b16 %v690, %v689
    %v766 = vpack.c.b16 %v692, %v691
    %v767 = vpack.c.b16 %v694, %v693
    %v768 = vpack.c.b16 %v696, %v695
    %v769 = vpack.c.b16 %v698, %v697
    %v770 = vpack.c.b16 %v700, %v699
    %v771 = vpack.c.b16 %v702, %v701
    %v772 = vpack.c.b16 %v704, %v703
    %v773 = vpack.c.b16 %v706, %v705
    %v774 = vpack.c.b16 %v708, %v707
    %v775 = vpack.c.b16 %v710, %v709
    %v776 = vpack.c.b16 %v712, %v711
    %v777 = vpack.c.b16 %v714, %v713
    %v778 = vpack.c.b16 %v716, %v715
    %v779 = vpack.c.b16 %v718, %v717
    %v780 = vpack.c.b16 %v720, %v719
    %v781 = vpack.c.b16 %v722, %v721
    %v782 = vpack.c.b16 %v724, %v723
    %v783 = vpack.c.b16 %v726, %v725
    %v784 = vpack.c.b16 %v728, %v727
    %841 = vmatprep.subr.bf16.mxu0 0
    %842 = vmatpush1.bf16.msra.mxu0 %v736
    %843 = vmatprep.subr.bf16.mxu0 0
    %844 = vmatpush1.bf16.msra.mxu0 %v735
    %845 = vmatprep.subr.bf16.mxu0 0
    %846 = vmatpush1.bf16.msra.mxu0 %v734
    %847 = vmatprep.subr.bf16.mxu0 0
    %848 = vmatpush1.bf16.msra.mxu0 %v733
    %849 = vmatprep.subr.bf16.mxu0 0
    %850 = vmatpush1.bf16.msra.mxu0 %v732
    %851 = vmatprep.subr.bf16.mxu0 0
    %852 = vmatpush1.bf16.msra.mxu0 %v731
    %853 = vmatprep.subr.bf16.mxu0 0
    %854 = vmatpush1.bf16.msra.mxu0 %v730
    %855 = vmatprep.subr.bf16.mxu0 0
    %856 = vmatpush1.bf16.msra.mxu0 %v729
    %857 = vmatprep.subr.bf16.mxu0 0
    %858 = vmatpush2.bf16.msra.mxu0 %v744
    %859 = vmatprep.subr.bf16.mxu0 0
    %860 = vmatpush2.bf16.msra.mxu0 %v743
    %861 = vmatprep.subr.bf16.mxu0 0
    %862 = vmatpush2.bf16.msra.mxu0 %v742
    %863 = vmatprep.subr.bf16.mxu0 0
    %864 = vmatpush2.bf16.msra.mxu0 %v741
    %865 = vmatprep.subr.bf16.mxu0 0
    %866 = vmatpush2.bf16.msra.mxu0 %v740
    %867 = vmatprep.subr.bf16.mxu0 0
    %868 = vmatpush2.bf16.msra.mxu0 %v739
    %869 = vmatprep.subr.bf16.mxu0 0
    %870 = vmatpush2.bf16.msra.mxu0 %v738
    %871 = vmatprep.subr.bf16.mxu0 0
    %872 = vmatpush2.bf16.msra.mxu0 %v737
    %873 = vmatprep.mubr.bf16.mxu0 %v380
    %874 = vmatmul.mubr.bf16.gmra.mxu0 %v379
    %v875 = vpop.f32.mrf.mxu0
    %v876 = vadd.f32 %v503, %v875
    %v877 = vpop.f32.mrf.mxu0
    %v878 = vpop.f32.mrf.mxu0
    %v879 = vpop.f32.mrf.mxu0
    %880 = vdwg.mxu0
    %881 = vmatprep.subr.bf16.mxu0 0
    %882 = vmatpush1.bf16.msra.mxu0 %v752
    %883 = vmatprep.subr.bf16.mxu0 0
    %884 = vmatpush1.bf16.msra.mxu0 %v751
    %885 = vmatprep.subr.bf16.mxu0 0
    %886 = vmatpush1.bf16.msra.mxu0 %v750
    %887 = vmatprep.subr.bf16.mxu0 0
    %888 = vmatpush1.bf16.msra.mxu0 %v749
    %889 = vmatprep.subr.bf16.mxu0 0
    %890 = vmatpush1.bf16.msra.mxu0 %v748
    %891 = vmatprep.subr.bf16.mxu0 0
    %892 = vmatpush1.bf16.msra.mxu0 %v747
    %893 = vmatprep.subr.bf16.mxu0 0
    %894 = vmatpush1.bf16.msra.mxu0 %v746
    %895 = vmatprep.subr.bf16.mxu0 0
    %896 = vmatpush1.bf16.msra.mxu0 %v745
    %897 = vmatprep.subr.bf16.mxu0 0
    %898 = vmatpush2.bf16.msra.mxu0 %v760
    %899 = vmatprep.subr.bf16.mxu0 0
    %900 = vmatpush2.bf16.msra.mxu0 %v759
    %901 = vmatprep.subr.bf16.mxu0 0
    %902 = vmatpush2.bf16.msra.mxu0 %v758
    %903 = vmatprep.subr.bf16.mxu0 0
    %904 = vmatpush2.bf16.msra.mxu0 %v757
    %905 = vmatprep.subr.bf16.mxu0 0
    %906 = vmatpush2.bf16.msra.mxu0 %v756
    %907 = vmatprep.subr.bf16.mxu0 0
    %908 = vmatpush2.bf16.msra.mxu0 %v755
    %909 = vmatprep.subr.bf16.mxu0 0
    %910 = vmatpush2.bf16.msra.mxu0 %v754
    %911 = vmatprep.subr.bf16.mxu0 0
    %912 = vmatpush2.bf16.msra.mxu0 %v753
    %913 = vmatprep.mubr.bf16.mxu0 %v382
    %914 = vmatmul.mubr.bf16.gmra.mxu0 %v381
    %v915 = vpop.f32.mrf.mxu0
    %v916 = vadd.f32 %v876, %v915
    %v917 = vpop.f32.mrf.mxu0
    %v918 = vpop.f32.mrf.mxu0
    %v919 = vpop.f32.mrf.mxu0
    %920 = vdwg.mxu0
    %921 = vmatprep.subr.bf16.mxu0 0
    %922 = vmatpush1.bf16.msra.mxu0 %v768
    %923 = vmatprep.subr.bf16.mxu0 0
    %924 = vmatpush1.bf16.msra.mxu0 %v767
    %925 = vmatprep.subr.bf16.mxu0 0
    %926 = vmatpush1.bf16.msra.mxu0 %v766
    %927 = vmatprep.subr.bf16.mxu0 0
    %928 = vmatpush1.bf16.msra.mxu0 %v765
    %929 = vmatprep.subr.bf16.mxu0 0
    %930 = vmatpush1.bf16.msra.mxu0 %v764
    %931 = vmatprep.subr.bf16.mxu0 0
    %932 = vmatpush1.bf16.msra.mxu0 %v763
    %933 = vmatprep.subr.bf16.mxu0 0
    %934 = vmatpush1.bf16.msra.mxu0 %v762
    %935 = vmatprep.subr.bf16.mxu0 0
    %936 = vmatpush1.bf16.msra.mxu0 %v761
    %937 = vmatprep.subr.bf16.mxu0 0
    %938 = vmatpush2.bf16.msra.mxu0 %v776
    %939 = vmatprep.subr.bf16.mxu0 0
    %940 = vmatpush2.bf16.msra.mxu0 %v775
    %941 = vmatprep.subr.bf16.mxu0 0
    %942 = vmatpush2.bf16.msra.mxu0 %v774
    %943 = vmatprep.subr.bf16.mxu0 0
    %944 = vmatpush2.bf16.msra.mxu0 %v773
    %945 = vmatprep.subr.bf16.mxu0 0
    %946 = vmatpush2.bf16.msra.mxu0 %v772
    %947 = vmatprep.subr.bf16.mxu0 0
    %948 = vmatpush2.bf16.msra.mxu0 %v771
    %949 = vmatprep.subr.bf16.mxu0 0
    %950 = vmatpush2.bf16.msra.mxu0 %v770
    %951 = vmatprep.subr.bf16.mxu0 0
    %952 = vmatpush2.bf16.msra.mxu0 %v769
    %953 = vmatprep.mubr.bf16.mxu0 %v384
    %954 = vmatmul.mubr.bf16.gmra.mxu0 %v383
    %v955 = vpop.f32.mrf.mxu0
    %v956 = vadd.f32 %v916, %v955
    %v957 = vpop.f32.mrf.mxu0
    %v958 = vpop.f32.mrf.mxu0
    %v959 = vpop.f32.mrf.mxu0
    %960 = vdwg.mxu0
    %961 = vmatprep.subr.bf16.mxu0 0
    %962 = vmatpush1.bf16.msra.mxu0 %v784
    %963 = vmatprep.subr.bf16.mxu0 0
    %964 = vmatpush1.bf16.msra.mxu0 %v783
    %965 = vmatprep.subr.bf16.mxu0 0
    %966 = vmatpush1.bf16.msra.mxu0 %v782
    %967 = vmatprep.subr.bf16.mxu0 0
    %968 = vmatpush1.bf16.msra.mxu0 %v781
    %969 = vmatprep.subr.bf16.mxu0 0
    %970 = vmatpush1.bf16.msra.mxu0 %v780
    %971 = vmatprep.subr.bf16.mxu0 0
    %972 = vmatpush1.bf16.msra.mxu0 %v779
    %973 = vmatprep.subr.bf16.mxu0 0
    %974 = vmatpush1.bf16.msra.mxu0 %v778
    %975 = vmatprep.subr.bf16.mxu0 0
    %976 = vmatpush1.bf16.msra.mxu0 %v777
    %977 = vmatprep.subr.bf16.mxu0 0
    %978 = vmatpush2.bf16.msra.mxu0 0
    %979 = vmatprep.subr.bf16.mxu0 0
    %980 = vmatpush2.bf16.msra.mxu0 0
    %981 = vmatprep.subr.bf16.mxu0 0
    %982 = vmatpush2.bf16.msra.mxu0 0
    %983 = vmatprep.subr.bf16.mxu0 0
    %984 = vmatpush2.bf16.msra.mxu0 0
    %985 = vmatprep.subr.bf16.mxu0 0
    %986 = vmatpush2.bf16.msra.mxu0 0
    %987 = vmatprep.subr.bf16.mxu0 0
    %988 = vmatpush2.bf16.msra.mxu0 0
    %989 = vmatprep.subr.bf16.mxu0 0
    %990 = vmatpush2.bf16.msra.mxu0 0
    %991 = vmatprep.subr.bf16.mxu0 0
    %992 = vmatpush2.bf16.msra.mxu0 0
    %993 = vmatprep.mubr.bf16.mxu0 0
    %994 = vmatmul.mubr.bf16.gmra.mxu0 %v385
    %v995 = vpop.f32.mrf.mxu0
    %v996 = vadd.f32 %v956, %v995
    %v997 = vpop.f32.mrf.mxu0
    %v998 = vpop.f32.mrf.mxu0
    %v999 = vpop.f32.mrf.mxu0
    %1000 = vdwg.mxu0
    %1001 = vst [vmem:[#allocation9] sm:$0xff] %v996
    // Predicated region
    $region34: #{deterministic_decoder.1} parent=1 // pred_check
      _
    $region35: #{deterministic_decoder.1} parent=1 // pred_check_branch
      %1003 = sbr.rel (0) target = $region37
    $region36: #{deterministic_decoder.1} parent=1 // pred_region
      %s1005 = ssub.s32 128, 128
      %1006 = vsyncadd [#allocation5], %s1005
      %s1008 = sshll.u32 [#allocation9], 4
      %s1009 = int_to_ptr.vmem [resolvable:$true] %s1008
      %1011 = dma.vmem_to_hbm [thread:$0]  %s1009, 128, %s5, [#allocation5]
    $region37: #{deterministic_decoder.1} parent=1 // pred_fallthru
      _
    // Predicated region
    $region38: #{deterministic_decoder.1} parent=1 // pred_check
      _
    $region39: #{deterministic_decoder.1} parent=1 // pred_check_branch
      %1013 = sbr.rel (0) target = $region41
    $region40: #{deterministic_decoder.1} parent=1 // pred_region
      %1014 = dma.done [#allocation5], 128
    $region41: #{deterministic_decoder.1} parent=1 // pred_fallthru
      _
    %1015 = vsyncpa [#allocation4], 1
    %1016 = vsyncpa [#allocation7], 1
    %1017 = vsyncpa [#allocation5], 1

</llo_original>
